<compile_context>
chip_gen: v7x
topology: tpu7x:2x2x1
jax: 0.10.0
libtpu: 0.0.40
codegen_flags: <defaults>
</compile_context>

<pallas_src>
import functools

import jax
import jax.numpy as jnp
import numpy as np
from jax import lax
from jax.experimental import pallas as pl
from jax.experimental.pallas import tpu as pltpu

_EPS = 1e-5


# ----------------------------- small helpers ------------------------------- #

def _round_up(x, m):
    return (x + m - 1) // m * m


def _pad2d(a, rows, cols):
    r, c = a.shape
    if r == rows and c == cols:
        return a
    return jnp.pad(a, ((0, rows - r), (0, cols - c)))


@functools.lru_cache(maxsize=1)
def _vmem_budget_bytes():
    """Half of physical VMEM (headroom for compiler scratch / pipeline bufs)."""
    try:
        cap = int(getattr(pltpu.get_tpu_info(), "vmem_capacity_bytes", 64 << 20))
    except Exception:  # pragma: no cover - conservative fallback off-TPU
        cap = 64 << 20
    return max(4 << 20, cap // 2)


def _choose_tile_m(m, per_row_bytes, fixed_bytes):
    """Kernel-specific M tile: multiple of 16 (bf16 sublane packing), fits the
    per-kernel VMEM estimate, >= 2 grid steps when there is enough work (v7x
    has 2 TensorCores), and a balanced last tile (over-padding bounded by
    num_tiles * 16 rows instead of a full tile)."""
    budget = _vmem_budget_bytes()
    avail = max(budget - fixed_bytes, 16 * per_row_bytes)
    tile_max = min(1024, max(16, avail // max(per_row_bytes, 1)))
    tile_max = max(16, (tile_max // 16) * 16)
    num_tiles = max(1, -(-m // tile_max))
    if m >= 32:                       # enough rows to feed both v7x TCs
        num_tiles = max(num_tiles, 2)
    tile = _round_up(-(-m // num_tiles), 16)
    return tile, tile * num_tiles     # (tile_m, m_pad)


# ----------------------------- Pallas kernels ------------------------------ #
# MXU operands are bf16 (f32 accumulation); the epilogue (scale/bias, residual
# add, ReLU) stays in f32 on the VPU and only narrows at the final store.

def _matmul_bn_relu_kernel(p_ref, w_ref, s_ref, b_ref, o_ref):
    # out = relu((patches @ w) * scale + bias)        (conv1 + bn1 + relu)
    acc = jnp.dot(p_ref[...], w_ref[...], preferred_element_type=jnp.float32)
    o_ref[...] = jnp.maximum(acc * s_ref[...] + b_ref[...], 0.0).astype(o_ref.dtype)


def _matmul_bn_convsc_add_relu_kernel(p_ref, w_ref, s_ref, b_ref,
                                      xsc_ref, wsc_ref, ssc_ref, bsc_ref,
                                      o_ref):
    # main     = (patches @ w)  * scale + bias         (conv2 + bn2)
    # shortcut = (x_sc @ w_sc)  * ssc   + bsc          (1x1 conv + bn)
    # out      = relu(main + shortcut)
    main = jnp.dot(p_ref[...], w_ref[...], preferred_element_type=jnp.float32)
    main = main * s_ref[...] + b_ref[...]
    sc = jnp.dot(xsc_ref[...], wsc_ref[...], preferred_element_type=jnp.float32)
    sc = sc * ssc_ref[...] + bsc_ref[...]
    o_ref[...] = jnp.maximum(main + sc, 0.0).astype(o_ref.dtype)


def _matmul_bn_identity_add_relu_kernel(p_ref, w_ref, s_ref, b_ref, xid_ref,
                                        o_ref):
    # out = relu((patches @ w) * scale + bias + x)     (conv2 + bn2 + identity)
    main = jnp.dot(p_ref[...], w_ref[...], preferred_element_type=jnp.float32)
    main = main * s_ref[...] + b_ref[...] + xid_ref[...].astype(jnp.float32)
    o_ref[...] = jnp.maximum(main, 0.0).astype(o_ref.dtype)


def _run_tiled(kernel, inputs, row_tiled, tile_m, m_pad, n_pad, out_dtype):
    """Pipelined pallas_call: grid over M tiles, weights/scale replicated."""
    grid = (m_pad // tile_m,)
    in_specs = []
    for arr, tiled in zip(inputs, row_tiled):
        if tiled:
            in_specs.append(pl.BlockSpec((tile_m, arr.shape[1]),
                                         lambda i: (i, 0)))
        else:
            in_specs.append(pl.BlockSpec(arr.shape, lambda i: (0, 0)))
    out_specs = pl.BlockSpec((tile_m, n_pad), lambda i: (i, 0))
    return pl.pallas_call(
        kernel,
        out_shape=jax.ShapeDtypeStruct((m_pad, n_pad), out_dtype),
        grid=grid,
        in_specs=in_specs,
        out_specs=out_specs,
        compiler_params=pltpu.CompilerParams(
            dimension_semantics=("parallel",),
            vmem_limit_bytes=_vmem_budget_bytes(),
        ),
    )(*inputs)


# ------------------------------ JAX glue ----------------------------------- #

def _im2col_3x3(x_nhwc, stride):
    """3x3, padding=1 im2col.  Returns ([N*Ho*Wo, 9*C], Ho, Wo).
    Run on bf16 inputs so the 9x slab is materialized in bf16."""
    n, h, w, c = x_nhwc.shape
    xp = jnp.pad(x_nhwc, ((0, 0), (1, 1), (1, 1), (0, 0)))
    ho = (h - 1) // stride + 1
    wo = (w - 1) // stride + 1
    cols = []
    for dy in range(3):
        for dx in range(3):
            cols.append(xp[:, dy:dy + (ho - 1) * stride + 1:stride,
                              dx:dx + (wo - 1) * stride + 1:stride, :])
    patches = jnp.concatenate(cols, axis=-1)          # [N, Ho, Wo, 9*C]
    return patches.reshape(n * ho * wo, 9 * c), ho, wo


def _fold_bn(bn, n_pad):
    gamma, beta, mean, var = bn
    scale = (gamma / jnp.sqrt(var + _EPS)).astype(jnp.float32)
    bias = (beta - mean * scale).astype(jnp.float32)
    c = scale.shape[0]
    s = jnp.zeros((1, n_pad), jnp.float32).at[0, :c].set(scale)
    b = jnp.zeros((1, n_pad), jnp.float32).at[0, :c].set(bias)
    return s, b


def prepare_params(params, in_planes, planes, stride):
    """One-time prep: fold BN, transpose / pad / cast weights to bf16."""
    n_pad = _round_up(planes, 128)                    # lane-dense output (N)
    k1_pad = _round_up(9 * in_planes, 128)            # lane-dense contraction
    k2_pad = _round_up(9 * planes, 128)

    w1m = jnp.transpose(params["w1"], (2, 3, 1, 0)).reshape(9 * in_planes, planes)
    w2m = jnp.transpose(params["w2"], (2, 3, 1, 0)).reshape(9 * planes, planes)
    s1, b1 = _fold_bn(params["bn1"], n_pad)
    s2, b2 = _fold_bn(params["bn2"], n_pad)

    prep = {
        "stride": stride, "planes": planes, "in_planes": in_planes,
        "n_pad": n_pad, "k1_pad": k1_pad, "k2_pad": k2_pad,
        "w1": _pad2d(w1m, k1_pad, n_pad).astype(jnp.bfloat16),
        "s1": s1, "b1": b1,
        "w2": _pad2d(w2m, k2_pad, n_pad).astype(jnp.bfloat16),
        "s2": s2, "b2": b2,
        "has_sc_conv": stride != 1 or in_planes != planes,
    }
    if prep["has_sc_conv"]:
        ksc_pad = _round_up(in_planes, 128)
        wscm = jnp.transpose(params["wsc"][:, :, 0, 0], (1, 0))   # [cin, planes]
        prep["ksc_pad"] = ksc_pad
        prep["wsc"] = _pad2d(wscm, ksc_pad, n_pad).astype(jnp.bfloat16)
        prep["ssc"], prep["bsc"] = _fold_bn(params["bnsc"], n_pad)
    return prep


def basic_block_forward(x_nchw, prep):
    stride, planes, cin = prep["stride"], prep["planes"], prep["in_planes"]
    n_pad = prep["n_pad"]
    x = jnp.transpose(x_nchw, (0, 2, 3, 1)).astype(jnp.bfloat16)   # NHWC, bf16
    n, h, w, _ = x.shape

    # ---- conv1 (3x3, stride) + bn1 + relu -------------------------------- #
    p1, ho, wo = _im2col_3x3(x, stride)               # bf16 [M, 9*cin]
    m = n * ho * wo
    k1_pad = prep["k1_pad"]
    row1 = 4 * k1_pad + 8 * n_pad                     # bf16 patches + bf16 out + f32 acc
    fixed1 = 4 * k1_pad * n_pad + 16 * n_pad          # double-buffered weights + vecs
    tile1, m_pad1 = _choose_tile_m(m, row1, fixed1)
    p1p = _pad2d(p1, m_pad1, k1_pad)
    out1 = _run_tiled(_matmul_bn_relu_kernel,
                      [p1p, prep["w1"], prep["s1"], prep["b1"]],
                      [True, False, False, False],
                      tile1, m_pad1, n_pad, jnp.bfloat16)
    out1 = out1[:m, :planes].reshape(n, ho, wo, planes)

    # ---- conv2 (3x3, s=1) + bn2 + shortcut + add + relu (one kernel) ------ #
    p2, _, _ = _im2col_3x3(out1, 1)                   # bf16 [M, 9*planes]
    k2_pad = prep["k2_pad"]

    if prep["has_sc_conv"]:
        ksc_pad = prep["ksc_pad"]
        row2 = 4 * k2_pad + 4 * ksc_pad + 12 * n_pad
        fixed2 = 4 * (k2_pad + ksc_pad) * n_pad + 32 * n_pad
        tile2, m_pad2 = _choose_tile_m(m, row2, fixed2)
        p2p = _pad2d(p2, m_pad2, k2_pad)
        # 1x1-conv shortcut operand == x sampled at the stride == the
        # center-tap columns of the conv1 patch slab (already bf16 in HBM):
        # no extra strided gather / cast pass over x.
        xsc = p1[:, 4 * cin:5 * cin]
        xscp = _pad2d(xsc, m_pad2, ksc_pad)
        out = _run_tiled(
            _matmul_bn_convsc_add_relu_kernel,
            [p2p, prep["w2"], prep["s2"], prep["b2"],
             xscp, prep["wsc"], prep["ssc"], prep["bsc"]],
            [True, False, False, False, True, False, False, False],
            tile2, m_pad2, n_pad, jnp.bfloat16)
    else:
        row2 = 4 * k2_pad + 16 * n_pad
        fixed2 = 4 * k2_pad * n_pad + 16 * n_pad
        tile2, m_pad2 = _choose_tile_m(m, row2, fixed2)
        p2p = _pad2d(p2, m_pad2, k2_pad)
        # identity shortcut streamed as bf16; added in f32 inside the kernel
        xid = _pad2d(x.reshape(m, cin), m_pad2, n_pad)            # cin == planes
        out = _run_tiled(
            _matmul_bn_identity_add_relu_kernel,
            [p2p, prep["w2"], prep["s2"], prep["b2"], xid],
            [True, False, False, False, True],
            tile2, m_pad2, n_pad, jnp.bfloat16)

    out = out[:m, :planes].reshape(n, ho, wo, planes)
    return jnp.transpose(out, (0, 3, 1, 2))                       # back to NCHW


# ------------------------- params / reference ------------------------------ #

def init_params(key, in_planes, planes, stride):
    ks = jax.random.split(key, 16)
    f32 = jnp.float32

    def bn_params(k0, k1, k2, k3, c):
        return (1.0 + 0.1 * jax.random.normal(k0, (c,), f32),   # gamma
                0.1 * jax.random.normal(k1, (c,), f32),          # beta
                0.1 * jax.random.normal(k2, (c,), f32),          # running_mean
                0.5 + jax.random.uniform(k3, (c,), f32))         # running_var

    p = {
        "w1": 0.1 * jax.random.normal(ks[0], (planes, in_planes, 3, 3), f32),
        "bn1": bn_params(ks[1], ks[2], ks[3], ks[4], planes),
        "w2": 0.1 * jax.random.normal(ks[5], (planes, planes, 3, 3), f32),
        "bn2": bn_params(ks[6], ks[7], ks[8], ks[9], planes),
    }
    if stride != 1 or in_planes != planes:
        p["wsc"] = 0.1 * jax.random.normal(ks[10], (planes, in_planes, 1, 1), f32)
        p["bnsc"] = bn_params(ks[11], ks[12], ks[13], ks[14], planes)
    return p


def reference_forward(x_nchw, params, stride):
    x = jnp.transpose(x_nchw, (0, 2, 3, 1)).astype(jnp.float32)

    def conv(inp, wt, s, pad):
        w_hwio = jnp.transpose(wt, (2, 3, 1, 0))
        return lax.conv_general_dilated(
            inp, w_hwio, (s, s), [(pad, pad), (pad, pad)],
            dimension_numbers=("NHWC", "HWIO", "NHWC"))

    def bn(inp, prm):
        g, b, mu, var = prm
        return (inp - mu) / jnp.sqrt(var + _EPS) * g + b

    out = jax.nn.relu(bn(conv(x, params["w1"], stride, 1), params["bn1"]))
    out = bn(conv(out, params["w2"], 1, 1), params["bn2"])
    if "wsc" in params:
        sc = bn(conv(x, params["wsc"], stride, 0), params["bnsc"])
    else:
        sc = x
    out = jax.nn.relu(out + sc)
    return jnp.transpose(out, (0, 3, 1, 2))


# --------------------------------- main ------------------------------------ #

if __name__ == "__main__":
    key = jax.random.PRNGKey(0)
    kx, kp1, kp2 = jax.random.split(key, 3)

    x = jax.random.normal(kx, (2, 4, 16, 16), jnp.float32)   # NCHW, like PyTorch

    # bf16 MXU operands / bf16 activation stores (f32 accumulate & epilogue)
    # -> slightly looser comparison vs the f32 reference
    RTOL = ATOL = 3e-2

    # Case 1: downsampling block (stride=2, in_planes != planes) -> conv shortcut
    params1 = init_params(kp1, in_planes=4, planes=8, stride=2)
    prep1 = prepare_params(params1, in_planes=4, planes=8, stride=2)
    fwd1 = jax.jit(lambda xx: basic_block_forward(xx, prep1))
    y1 = jax.block_until_ready(fwd1(x))
    r1 = jax.block_until_ready(reference_forward(x, params1, stride=2))
    np.testing.assert_allclose(np.asarray(y1.astype(jnp.float32)),
                               np.asarray(r1), rtol=RTOL, atol=ATOL)
    assert y1.shape == (2, 8, 8, 8)

    # Case 2: identity-shortcut block (stride=1, in_planes == planes)
    params2 = init_params(kp2, in_planes=4, planes=4, stride=1)
    prep2 = prepare_params(params2, in_planes=4, planes=4, stride=1)
    fwd2 = jax.jit(lambda xx: basic_block_forward(xx, prep2))
    y2 = jax.block_until_ready(fwd2(x))
    r2 = jax.block_until_ready(reference_forward(x, params2, stride=1))
    np.testing.assert_allclose(np.asarray(y2.astype(jnp.float32)),
                               np.asarray(r2), rtol=RTOL, atol=ATOL)
    assert y2.shape == (2, 4, 16, 16)

    print("KERNEL_OK")
</pallas_src>

<mosaic_0001>
module attributes {stable_mosaic.version = 11 : i64} {
  func.func @_matmul_bn_relu_kernel(%arg0: i32, %arg1: memref<64x128xbf16, #tpu.memory_space<vmem>>, %arg2: memref<128x128xbf16, #tpu.memory_space<vmem>>, %arg3: memref<1x128xf32, #tpu.memory_space<vmem>>, %arg4: memref<1x128xf32, #tpu.memory_space<vmem>>, %arg5: memref<64x128xbf16, #tpu.memory_space<vmem>>) attributes {dimension_semantics = [#tpu.dimension_semantics<parallel>], iteration_bounds = array<i64: 2>, scalar_prefetch = 0 : i64, scratch_operands = 0 : i64, tpu.core_type = #tpu.core_type<tc>, window_params = [{transform_indices = @transform_0, window_bounds = array<i64: 64, 128>}, {pipeline_mode = #tpu.pipeline_mode<synchronous>, transform_indices = @transform_1, window_bounds = array<i64: 128, 128>}, {pipeline_mode = #tpu.pipeline_mode<synchronous>, transform_indices = @transform_2, window_bounds = array<i64: 1, 128>}, {pipeline_mode = #tpu.pipeline_mode<synchronous>, transform_indices = @transform_3, window_bounds = array<i64: 1, 128>}, {transform_indices = @transform_4, window_bounds = array<i64: 64, 128>}]} {
    %c0 = arith.constant 0 : index
    %c0_0 = arith.constant 0 : index
    %0 = vector.load %arg1[%c0, %c0_0] : memref<64x128xbf16, #tpu.memory_space<vmem>>, vector<64x128xbf16>
    %c0_1 = arith.constant 0 : index
    %c0_2 = arith.constant 0 : index
    %1 = vector.load %arg2[%c0_1, %c0_2] : memref<128x128xbf16, #tpu.memory_space<vmem>>, vector<128x128xbf16>
    %cst = arith.constant dense<0.000000e+00> : vector<64x128xf32>
    %2 = tpu.matmul %0, %1, %cst {dimension_numbers = #tpu.dot_dimension_numbers<[1], [0], [0], [1], [0, 0, 1, 1], [], []>} : vector<64x128xbf16>, vector<128x128xbf16>, vector<64x128xf32> -> vector<64x128xf32>
    %c0_3 = arith.constant 0 : index
    %c0_4 = arith.constant 0 : index
    %3 = vector.load %arg3[%c0_3, %c0_4] : memref<1x128xf32, #tpu.memory_space<vmem>>, vector<1x128xf32>
    %4 = vector.broadcast %3 : vector<1x128xf32> to vector<64x128xf32>
    %5 = arith.mulf %2, %4 : vector<64x128xf32>
    %c0_5 = arith.constant 0 : index
    %c0_6 = arith.constant 0 : index
    %6 = vector.load %arg4[%c0_5, %c0_6] : memref<1x128xf32, #tpu.memory_space<vmem>>, vector<1x128xf32>
    %7 = vector.broadcast %6 : vector<1x128xf32> to vector<64x128xf32>
    %8 = arith.addf %5, %7 : vector<64x128xf32>
    %cst_7 = arith.constant 0.000000e+00 : f32
    %9 = vector.broadcast %cst_7 : f32 to vector<64x128xf32>
    %10 = arith.maximumf %8, %9 : vector<64x128xf32>
    %11 = arith.truncf %10 : vector<64x128xf32> to vector<64x128xbf16>
    %c0_8 = arith.constant 0 : index
    %c0_9 = arith.constant 0 : index
    %12 = vector.load %arg5[%c0_8, %c0_9] : memref<64x128xbf16, #tpu.memory_space<vmem>>, vector<64x128xbf16>
    tpu.vector_store %arg5[%c0_8, %c0_9], %11 {strides = array<i32>} : memref<64x128xbf16, #tpu.memory_space<vmem>>, vector<64x128xbf16>,
    return
  }
  func.func @transform_0(%arg0: i32) -> (i32, i32) {
    %c0_i32 = arith.constant 0 : i32
    %c0_i32_0 = arith.constant 0 : i32
    return %arg0, %c0_i32 : i32, i32
  }
  func.func @transform_1(%arg0: i32) -> (i32, i32) {
    %c0_i32 = arith.constant 0 : i32
    %c0_i32_0 = arith.constant 0 : i32
    %c0_i32_1 = arith.constant 0 : i32
    return %c0_i32, %c0_i32_0 : i32, i32
  }
  func.func @transform_2(%arg0: i32) -> (i32, i32) {
    %c0_i32 = arith.constant 0 : i32
    %c0_i32_0 = arith.constant 0 : i32
    %c0_i32_1 = arith.constant 0 : i32
    return %c0_i32, %c0_i32_0 : i32, i32
  }
  func.func @transform_3(%arg0: i32) -> (i32, i32) {
    %c0_i32 = arith.constant 0 : i32
    %c0_i32_0 = arith.constant 0 : i32
    %c0_i32_1 = arith.constant 0 : i32
    return %c0_i32, %c0_i32_0 : i32, i32
  }
  func.func @transform_4(%arg0: i32) -> (i32, i32) {
    %c0_i32 = arith.constant 0 : i32
    %c0_i32_0 = arith.constant 0 : i32
    return %arg0, %c0_i32 : i32, i32
  }
}

module attributes {stable_mosaic.version = 11 : i64} {
  func.func @_matmul_bn_convsc_add_relu_kernel(%arg0: i32, %arg1: memref<64x128xbf16, #tpu.memory_space<vmem>>, %arg2: memref<128x128xbf16, #tpu.memory_space<vmem>>, %arg3: memref<1x128xf32, #tpu.memory_space<vmem>>, %arg4: memref<1x128xf32, #tpu.memory_space<vmem>>, %arg5: memref<64x128xbf16, #tpu.memory_space<vmem>>, %arg6: memref<128x128xbf16, #tpu.memory_space<vmem>>, %arg7: memref<1x128xf32, #tpu.memory_space<vmem>>, %arg8: memref<1x128xf32, #tpu.memory_space<vmem>>, %arg9: memref<64x128xbf16, #tpu.memory_space<vmem>>) attributes {dimension_semantics = [#tpu.dimension_semantics<parallel>], iteration_bounds = array<i64: 2>, scalar_prefetch = 0 : i64, scratch_operands = 0 : i64, tpu.core_type = #tpu.core_type<tc>, window_params = [{transform_indices = @transform_0, window_bounds = array<i64: 64, 128>}, {pipeline_mode = #tpu.pipeline_mode<synchronous>, transform_indices = @transform_1, window_bounds = array<i64: 128, 128>}, {pipeline_mode = #tpu.pipeline_mode<synchronous>, transform_indices = @transform_2, window_bounds = array<i64: 1, 128>}, {pipeline_mode = #tpu.pipeline_mode<synchronous>, transform_indices = @transform_3, window_bounds = array<i64: 1, 128>}, {transform_indices = @transform_4, window_bounds = array<i64: 64, 128>}, {pipeline_mode = #tpu.pipeline_mode<synchronous>, transform_indices = @transform_5, window_bounds = array<i64: 128, 128>}, {pipeline_mode = #tpu.pipeline_mode<synchronous>, transform_indices = @transform_6, window_bounds = array<i64: 1, 128>}, {pipeline_mode = #tpu.pipeline_mode<synchronous>, transform_indices = @transform_7, window_bounds = array<i64: 1, 128>}, {transform_indices = @transform_8, window_bounds = array<i64: 64, 128>}]} {
    %c0 = arith.constant 0 : index
    %c0_0 = arith.constant 0 : index
    %0 = vector.load %arg1[%c0, %c0_0] : memref<64x128xbf16, #tpu.memory_space<vmem>>, vector<64x128xbf16>
    %c0_1 = arith.constant 0 : index
    %c0_2 = arith.constant 0 : index
    %1 = vector.load %arg2[%c0_1, %c0_2] : memref<128x128xbf16, #tpu.memory_space<vmem>>, vector<128x128xbf16>
    %cst = arith.constant dense<0.000000e+00> : vector<64x128xf32>
    %2 = tpu.matmul %0, %1, %cst {dimension_numbers = #tpu.dot_dimension_numbers<[1], [0], [0], [1], [0, 0, 1, 1], [], []>} : vector<64x128xbf16>, vector<128x128xbf16>, vector<64x128xf32> -> vector<64x128xf32>
    %c0_3 = arith.constant 0 : index
    %c0_4 = arith.constant 0 : index
    %3 = vector.load %arg3[%c0_3, %c0_4] : memref<1x128xf32, #tpu.memory_space<vmem>>, vector<1x128xf32>
    %4 = vector.broadcast %3 : vector<1x128xf32> to vector<64x128xf32>
    %5 = arith.mulf %2, %4 : vector<64x128xf32>
    %c0_5 = arith.constant 0 : index
    %c0_6 = arith.constant 0 : index
    %6 = vector.load %arg4[%c0_5, %c0_6] : memref<1x128xf32, #tpu.memory_space<vmem>>, vector<1x128xf32>
    %7 = vector.broadcast %6 : vector<1x128xf32> to vector<64x128xf32>
    %8 = arith.addf %5, %7 : vector<64x128xf32>
    %c0_7 = arith.constant 0 : index
    %c0_8 = arith.constant 0 : index
    %9 = vector.load %arg5[%c0_7, %c0_8] : memref<64x128xbf16, #tpu.memory_space<vmem>>, vector<64x128xbf16>
    %c0_9 = arith.constant 0 : index
    %c0_10 = arith.constant 0 : index
    %10 = vector.load %arg6[%c0_9, %c0_10] : memref<128x128xbf16, #tpu.memory_space<vmem>>, vector<128x128xbf16>
    %cst_11 = arith.constant dense<0.000000e+00> : vector<64x128xf32>
    %11 = tpu.matmul %9, %10, %cst_11 {dimension_numbers = #tpu.dot_dimension_numbers<[1], [0], [0], [1], [0, 0, 1, 1], [], []>} : vector<64x128xbf16>, vector<128x128xbf16>, vector<64x128xf32> -> vector<64x128xf32>
    %c0_12 = arith.constant 0 : index
    %c0_13 = arith.constant 0 : index
    %12 = vector.load %arg7[%c0_12, %c0_13] : memref<1x128xf32, #tpu.memory_space<vmem>>, vector<1x128xf32>
    %13 = vector.broadcast %12 : vector<1x128xf32> to vector<64x128xf32>
    %14 = arith.mulf %11, %13 : vector<64x128xf32>
    %c0_14 = arith.constant 0 : index
    %c0_15 = arith.constant 0 : index
    %15 = vector.load %arg8[%c0_14, %c0_15] : memref<1x128xf32, #tpu.memory_space<vmem>>, vector<1x128xf32>
    %16 = vector.broadcast %15 : vector<1x128xf32> to vector<64x128xf32>
    %17 = arith.addf %14, %16 : vector<64x128xf32>
    %18 = arith.addf %8, %17 : vector<64x128xf32>
    %cst_16 = arith.constant 0.000000e+00 : f32
    %19 = vector.broadcast %cst_16 : f32 to vector<64x128xf32>
    %20 = arith.maximumf %18, %19 : vector<64x128xf32>
    %21 = arith.truncf %20 : vector<64x128xf32> to vector<64x128xbf16>
    %c0_17 = arith.constant 0 : index
    %c0_18 = arith.constant 0 : index
    %22 = vector.load %arg9[%c0_17, %c0_18] : memref<64x128xbf16, #tpu.memory_space<vmem>>, vector<64x128xbf16>
    tpu.vector_store %arg9[%c0_17, %c0_18], %21 {strides = array<i32>} : memref<64x128xbf16, #tpu.memory_space<vmem>>, vector<64x128xbf16>,
    return
  }
  func.func @transform_0(%arg0: i32) -> (i32, i32) {
    %c0_i32 = arith.constant 0 : i32
    %c0_i32_0 = arith.constant 0 : i32
    return %arg0, %c0_i32 : i32, i32
  }
  func.func @transform_1(%arg0: i32) -> (i32, i32) {
    %c0_i32 = arith.constant 0 : i32
    %c0_i32_0 = arith.constant 0 : i32
    %c0_i32_1 = arith.constant 0 : i32
    return %c0_i32, %c0_i32_0 : i32, i32
  }
  func.func @transform_2(%arg0: i32) -> (i32, i32) {
    %c0_i32 = arith.constant 0 : i32
    %c0_i32_0 = arith.constant 0 : i32
    %c0_i32_1 = arith.constant 0 : i32
    return %c0_i32, %c0_i32_0 : i32, i32
  }
  func.func @transform_3(%arg0: i32) -> (i32, i32) {
    %c0_i32 = arith.constant 0 : i32
    %c0_i32_0 = arith.constant 0 : i32
    %c0_i32_1 = arith.constant 0 : i32
    return %c0_i32, %c0_i32_0 : i32, i32
  }
  func.func @transform_4(%arg0: i32) -> (i32, i32) {
    %c0_i32 = arith.constant 0 : i32
    %c0_i32_0 = arith.constant 0 : i32
    return %arg0, %c0_i32 : i32, i32
  }
  func.func @transform_5(%arg0: i32) -> (i32, i32) {
    %c0_i32 = arith.constant 0 : i32
    %c0_i32_0 = arith.constant 0 : i32
    %c0_i32_1 = arith.constant 0 : i32
    return %c0_i32, %c0_i32_0 : i32, i32
  }
  func.func @transform_6(%arg0: i32) -> (i32, i32) {
    %c0_i32 = arith.constant 0 : i32
    %c0_i32_0 = arith.constant 0 : i32
    %c0_i32_1 = arith.constant 0 : i32
    return %c0_i32, %c0_i32_0 : i32, i32
  }
  func.func @transform_7(%arg0: i32) -> (i32, i32) {
    %c0_i32 = arith.constant 0 : i32
    %c0_i32_0 = arith.constant 0 : i32
    %c0_i32_1 = arith.constant 0 : i32
    return %c0_i32, %c0_i32_0 : i32, i32
  }
  func.func @transform_8(%arg0: i32) -> (i32, i32) {
    %c0_i32 = arith.constant 0 : i32
    %c0_i32_0 = arith.constant 0 : i32
    return %arg0, %c0_i32 : i32, i32
  }
}

</mosaic_0001>

<llo_original>
// kernel: _lambda_.2
$region0: #{_lambda_.2}
  #allocation0 [shape = 'u32[]', space=smem, size = 0x4, offset = 0x4, fixed_abs, tag = 'smem constant byte address 0x4 - core index']
  #allocation1 [shape = 'u32[144,128]{1,0:T(1,128)}', space=vmem, size = 0x12000, scoped, tag = 'internal scratch']
  %s0 = inlined_call_operand.vmem [shape: bf16[128,128], index: 0, kind: input, shape index: {}]
  %s1 = inlined_call_operand.vmem [shape: bf16[128,128], index: 1, kind: input, shape index: {}]
  %s2 = inlined_call_operand.vmem [shape: f32[1,128], index: 2, kind: input, shape index: {}]
  %s3 = inlined_call_operand.vmem [shape: f32[1,128], index: 3, kind: input, shape index: {}]
  %s4 = inlined_call_operand.vmem [shape: bf16[128,128], index: 4, kind: output, shape index: {}]
  %s5 = sld [smem:[#allocation0]]
  $region49: #{_lambda_.2} parent=0
    _
  %s7 = ssub.s32 1, %s5
  %s8 = scalar_select 0, %s7, %s5
  loop: start=0, step=1, limit=4
  $region2: #{_lambda_.2} parent=0 // loop_pre_header
    _
  $region3: #{_lambda_.2} parent=0 // loop_header
    %s10 = sphi 0, %s14
    %p11 = scmp.ge.s32.totalorder %s10, 4
    %s20 = sphi 0, %s22
    %s23 = sphi 0, %s20
    %s24 = sphi 0, %s23
    %s40 = sphi 0, %s24
    %s44 = sphi 0, %s44
    %s46 = sphi 0, %s44
    %s47 = sphi 0, %s46
    %s61 = sphi 0, %s47
    %s65 = sphi 0, %s65
    %s67 = sphi 0, %s65
    %s68 = sphi 0, %s67
    %s82 = sphi 0, %s68
    %s86 = sphi 0, %s86
    %s88 = sphi 0, %s86
    %s89 = sphi 0, %s88
    %s103 = sphi 0, %s89
    %s109 = sphi 0, %s111
    %s112 = sphi 0, %s109
    %s113 = sphi 0, %s112
    %s129 = sphi 0, %s113
  $region4: #{_lambda_.2} parent=0 // loop_header_branch
    %13 = sbr.rel (%p11) target = $region8
  $region5: #{_lambda_.2} parent=0 // loop_body
    %s15 = ssub.s32 %s10, 1
    %s16 = ssub.s32 %s10, 2
    %s17 = sadd.s32 %s10, 1
    %s18 = ssub.s32 %s10, %s17
    %p19 = scmp.eq.s32.totalorder %s18, 0
    %s21 = sadd.s32 %s20, 1
    %s22 = scalar_select %p19, %s20, %s21
    %p25 = pneg %p19
    %p26 = scmp.eq.s32.totalorder %s10, 1
    %p27 = por %p25, %p26
    %p28 = scmp.ne.s32.totalorder %s20, %s23
    %p29 = scmp.eq.s32.totalorder %s10, 0
    %p30 = por %p28, %p29
    %p31 = scmp.ne.s32.totalorder %s20, %s23
    %p32 = scmp.eq.s32.totalorder %s15, 1
    %p33 = por %p31, %p32
    %p34 = scmp.ne.s32.totalorder %s23, %s24
    %p35 = scmp.eq.s32.totalorder %s15, 0
    %p36 = por %p34, %p35
    %p37 = scmp.ne.s32.totalorder %s23, %s24
    %p38 = scmp.eq.s32.totalorder %s16, 1
    %p39 = por %p37, %p38
    %p41 = scmp.ne.s32.totalorder %s24, %s40
    %p42 = scmp.eq.s32.totalorder %s16, 0
    %p43 = por %p41, %p42
    %s45 = sadd.s32 %s44, 1
    %p48 = scmp.eq.s32.totalorder %s10, 1
    %p49 = scmp.ne.s32.totalorder %s44, %s46
    %p50 = scmp.eq.s32.totalorder %s10, 0
    %p51 = por %p49, %p50
    %p52 = scmp.ne.s32.totalorder %s44, %s46
    %p53 = scmp.eq.s32.totalorder %s15, 1
    %p54 = por %p52, %p53
    %p55 = scmp.ne.s32.totalorder %s46, %s47
    %p56 = scmp.eq.s32.totalorder %s15, 0
    %p57 = por %p55, %p56
    %p58 = scmp.ne.s32.totalorder %s46, %s47
    %p59 = scmp.eq.s32.totalorder %s16, 1
    %p60 = por %p58, %p59
    %p62 = scmp.ne.s32.totalorder %s47, %s61
    %p63 = scmp.eq.s32.totalorder %s16, 0
    %p64 = por %p62, %p63
    %s66 = sadd.s32 %s65, 1
    %p69 = scmp.eq.s32.totalorder %s10, 1
    %p70 = scmp.ne.s32.totalorder %s65, %s67
    %p71 = scmp.eq.s32.totalorder %s10, 0
    %p72 = por %p70, %p71
    %p73 = scmp.ne.s32.totalorder %s65, %s67
    %p74 = scmp.eq.s32.totalorder %s15, 1
    %p75 = por %p73, %p74
    %p76 = scmp.ne.s32.totalorder %s67, %s68
    %p77 = scmp.eq.s32.totalorder %s15, 0
    %p78 = por %p76, %p77
    %p79 = scmp.ne.s32.totalorder %s67, %s68
    %p80 = scmp.eq.s32.totalorder %s16, 1
    %p81 = por %p79, %p80
    %p83 = scmp.ne.s32.totalorder %s68, %s82
    %p84 = scmp.eq.s32.totalorder %s16, 0
    %p85 = por %p83, %p84
    %s87 = sadd.s32 %s86, 1
    %p90 = scmp.eq.s32.totalorder %s10, 1
    %p91 = scmp.ne.s32.totalorder %s86, %s88
    %p92 = scmp.eq.s32.totalorder %s10, 0
    %p93 = por %p91, %p92
    %p94 = scmp.ne.s32.totalorder %s86, %s88
    %p95 = scmp.eq.s32.totalorder %s15, 1
    %p96 = por %p94, %p95
    %p97 = scmp.ne.s32.totalorder %s88, %s89
    %p98 = scmp.eq.s32.totalorder %s15, 0
    %p99 = por %p97, %p98
    %p100 = scmp.ne.s32.totalorder %s88, %s89
    %p101 = scmp.eq.s32.totalorder %s16, 1
    %p102 = por %p100, %p101
    %p104 = scmp.ne.s32.totalorder %s89, %s103
    %p105 = scmp.eq.s32.totalorder %s16, 0
    %p106 = por %p104, %p105
    %s107 = ssub.s32 %s10, %s17
    %p108 = scmp.eq.s32.totalorder %s107, 0
    %s110 = sadd.s32 %s109, 1
    %s111 = scalar_select %p108, %s109, %s110
    %p114 = pneg %p108
    %p115 = scmp.eq.s32.totalorder %s10, 1
    %p116 = por %p114, %p115
    %p117 = scmp.ne.s32.totalorder %s109, %s112
    %p118 = scmp.eq.s32.totalorder %s10, 0
    %p119 = por %p117, %p118
    %p120 = scmp.ne.s32.totalorder %s109, %s112
    %p121 = scmp.eq.s32.totalorder %s15, 1
    %p122 = por %p120, %p121
    %p123 = scmp.ne.s32.totalorder %s112, %s113
    %p124 = scmp.eq.s32.totalorder %s15, 0
    %p125 = por %p123, %p124
    %p126 = scmp.ne.s32.totalorder %s112, %s113
    %p127 = scmp.eq.s32.totalorder %s16, 1
    %p128 = por %p126, %p127
    %p130 = scmp.ne.s32.totalorder %s113, %s129
    %p131 = scmp.eq.s32.totalorder %s16, 0
    %p132 = por %p130, %p131
    %p133 = scmp.le.s32.totalorder 1, %s10
    %p134 = scmp.lt.s32.totalorder %s10, 3
    %p135 = pnand %p133, %p134
    %p136 = pneg %p135
    // Predicated region
    $region9: #{_lambda_.2} parent=5 // pred_check
      _
    $region10: #{_lambda_.2} parent=5 // pred_check_branch
      %138 = sbr.rel (%p135) target = $region12
    $region11: #{_lambda_.2} parent=5 // pred_region
      %s139 = ssub.s32 %s10, 1
      // Predicated region
      $region13: #{_lambda_.2} parent=11 // pred_check
        %p140 = pneg %p57
      $region14: #{_lambda_.2} parent=11 // pred_check_branch
        %142 = sbr.rel (%p140) target = $region16
      $region15: #{_lambda_.2} parent=11 // pred_region
        _
      $region16: #{_lambda_.2} parent=11 // pred_fallthru
        _
      // Predicated region
      $region17: #{_lambda_.2} parent=11 // pred_check
        %p143 = pneg %p78
      $region18: #{_lambda_.2} parent=11 // pred_check_branch
        %145 = sbr.rel (%p143) target = $region20
      $region19: #{_lambda_.2} parent=11 // pred_region
        _
      $region20: #{_lambda_.2} parent=11 // pred_fallthru
        _
      // Predicated region
      $region21: #{_lambda_.2} parent=11 // pred_check
        %p146 = pneg %p99
      $region22: #{_lambda_.2} parent=11 // pred_check_branch
        %148 = sbr.rel (%p146) target = $region24
      $region23: #{_lambda_.2} parent=11 // pred_region
        _
      $region24: #{_lambda_.2} parent=11 // pred_fallthru
        _
    $region12: #{_lambda_.2} parent=5 // pred_fallthru
      _
    %p149 = scmp.lt.s32.totalorder %s10, 2
    // Predicated region
    $region25: #{_lambda_.2} parent=5 // pred_check
      %p150 = pneg %p149
    $region26: #{_lambda_.2} parent=5 // pred_check_branch
      %152 = sbr.rel (%p150) target = $region28
    $region27: #{_lambda_.2} parent=5 // pred_region
      // Predicated region
      $region29: #{_lambda_.2} parent=27 // pred_check
        %p153 = pneg %p30
      $region30: #{_lambda_.2} parent=27 // pred_check_branch
        %155 = sbr.rel (%p153) target = $region32
      $region31: #{_lambda_.2} parent=27 // pred_region
        %s156 = smul.u32 8, %s10
        %p157 = scmp.lt.s32.totalorder %s156, 15
        %s158 = scalar_select %p157, %s156, 15
        %s159 = smul.addr %s158, 4
        %s160 = scalar_lea.vmem %s0, %s159
        %s161 = smul.u32 8, %s10
      $region32: #{_lambda_.2} parent=27 // pred_fallthru
        _
    $region28: #{_lambda_.2} parent=5 // pred_fallthru
      _
    %p162 = scmp.le.s32.totalorder 1, %s10
    %p163 = scmp.lt.s32.totalorder %s10, 3
    %p164 = pnand %p162, %p163
    %p165 = pneg %p164
    // Predicated region
    $region33: #{_lambda_.2} parent=5 // pred_check
      _
    $region34: #{_lambda_.2} parent=5 // pred_check_branch
      %167 = sbr.rel (%p164) target = $region36
    $region35: #{_lambda_.2} parent=5 // pred_region
      %s168 = ssub.s32 %s10, 1
      %s169 = smul.u32 8, %s15
      %p170 = scmp.lt.s32.totalorder %s169, 15
      %s171 = scalar_select %p170, %s169, 15
      %s172 = smul.addr %s171, 4
      %s173 = scalar_lea.vmem %s0, %s172
      %p174 = pneg %p36
      %p175 = pneg %p33
      %p176 = pneg %p57
      %p177 = pneg %p54
      %p178 = pneg %p78
      %p179 = pneg %p75
      %p180 = pneg %p99
      %p181 = pneg %p96
      %p182 = pneg %p125
      %p183 = pneg %p122
      %s184 = smul.u32 8, %s15
      %p185 = scmp.lt.s32.totalorder %s184, 15
      %s186 = scalar_select %p185, %s184, 15
      %s187 = smul.addr %s186, 4
      %s188 = scalar_lea.vmem %s4, %s187
      %s189 = smul.u32 8, %s15
      %p190 = scmp.lt.s32.totalorder %s189, 15
      %s191 = scalar_select %p190, %s189, 15
      %s192 = smul.addr %s191, 4
      %s193 = scalar_lea.vmem %s0, %s192
      %s194 = smul.u32 8, %s15
      %s195 = smul.u32 8, %s15
      %p196 = scmp.lt.s32.totalorder %s195, 15
      %s197 = scalar_select %p196, %s195, 15
      %s198 = smul.addr %s197, 4
      %s199 = scalar_lea.vmem %s4, %s198
      %s200 = smul.u32 8, %s15
      %v202 = vld [vmem:[%s193] sm:$0xf]
      %v203 = vld [vmem:[%s193 + $0x4] sm:$0xf]
      %v204 = vld [vmem:[%s193 + $0x8] sm:$0xf]
      %v205 = vld [vmem:[%s193 + $0xc] sm:$0xf]
      %v206 = vld [vmem:[%s193 + $0x10] sm:$0xf]
      %v207 = vld [vmem:[%s193 + $0x14] sm:$0xf]
      %v208 = vld [vmem:[%s193 + $0x18] sm:$0xf]
      %v209 = vld [vmem:[%s193 + $0x1c] sm:$0xf]
      %v210 = vld [vmem:[%s1] sm:$0xf]
      %v211 = vld [vmem:[%s1 + $0x4] sm:$0xf]
      %v212 = vld [vmem:[%s1 + $0x8] sm:$0xf]
      %v213 = vld [vmem:[%s1 + $0xc] sm:$0xf]
      %v214 = vld [vmem:[%s1 + $0x10] sm:$0xf]
      %v215 = vld [vmem:[%s1 + $0x14] sm:$0xf]
      %v216 = vld [vmem:[%s1 + $0x18] sm:$0xf]
      %v217 = vld [vmem:[%s1 + $0x1c] sm:$0xf]
      %v218 = vld [vmem:[%s1 + $0x20] sm:$0xf]
      %v219 = vld [vmem:[%s1 + $0x24] sm:$0xf]
      %v220 = vld [vmem:[%s1 + $0x28] sm:$0xf]
      %v221 = vld [vmem:[%s1 + $0x2c] sm:$0xf]
      %v222 = vld [vmem:[%s1 + $0x30] sm:$0xf]
      %v223 = vld [vmem:[%s1 + $0x34] sm:$0xf]
      %v224 = vld [vmem:[%s1 + $0x38] sm:$0xf]
      %v225 = vld [vmem:[%s1 + $0x3c] sm:$0xf]
      %v234 = vunpack.c.l.b16 %v202
      %v235 = vunpack.c.l.b16 %v203
      %v236 = vunpack.c.l.b16 %v204
      %v237 = vunpack.c.l.b16 %v205
      %v238 = vunpack.c.l.b16 %v206
      %v239 = vunpack.c.l.b16 %v207
      %v240 = vunpack.c.l.b16 %v208
      %v241 = vunpack.c.l.b16 %v209
      %v242 = vpack.c.b16 %v235, %v234
      %v243 = vpack.c.b16 %v237, %v236
      %v244 = vpack.c.b16 %v239, %v238
      %v245 = vpack.c.b16 %v241, %v240
      %v266 = vunpack.c.l.b16 %v210
      %v267 = vunpack.c.l.b16 %v211
      %v268 = vunpack.c.l.b16 %v212
      %v269 = vunpack.c.l.b16 %v213
      %v270 = vunpack.c.l.b16 %v214
      %v271 = vunpack.c.l.b16 %v215
      %v272 = vunpack.c.l.b16 %v216
      %v273 = vunpack.c.l.b16 %v217
      %v274 = vunpack.c.l.b16 %v218
      %v275 = vunpack.c.l.b16 %v219
      %v276 = vunpack.c.l.b16 %v220
      %v277 = vunpack.c.l.b16 %v221
      %v278 = vunpack.c.l.b16 %v222
      %v279 = vunpack.c.l.b16 %v223
      %v280 = vunpack.c.l.b16 %v224
      %v281 = vunpack.c.l.b16 %v225
      %v282 = vpack.c.b16 %v267, %v266
      %v283 = vpack.c.b16 %v269, %v268
      %v284 = vpack.c.b16 %v271, %v270
      %v285 = vpack.c.b16 %v273, %v272
      %v286 = vpack.c.b16 %v275, %v274
      %v287 = vpack.c.b16 %v277, %v276
      %v288 = vpack.c.b16 %v279, %v278
      %v289 = vpack.c.b16 %v281, %v280
      %298 = vmatprep.subr.bf16.mxu0 0
      %299 = vmatpush1.bf16.msra.mxu0 %v282
      %300 = vmatprep.subr.bf16.mxu0 0
      %301 = vmatpush1.bf16.msra.mxu0 %v283
      %302 = vmatprep.subr.bf16.mxu0 0
      %303 = vmatpush1.bf16.msra.mxu0 %v284
      %304 = vmatprep.subr.bf16.mxu0 0
      %305 = vmatpush1.bf16.msra.mxu0 %v285
      %306 = vmatprep.subr.bf16.mxu0 0
      %307 = vmatpush1.bf16.msra.mxu0 %v286
      %308 = vmatprep.subr.bf16.mxu0 0
      %309 = vmatpush1.bf16.msra.mxu0 %v287
      %310 = vmatprep.subr.bf16.mxu0 0
      %311 = vmatpush1.bf16.msra.mxu0 %v288
      %312 = vmatprep.subr.bf16.mxu0 0
      %313 = vmatpush1.bf16.msra.mxu0 %v289
      %314 = vmatprep.subr.bf16.mxu0 0
      %315 = vmatpush1.bf16.msra.mxu0 0
      %316 = vmatprep.subr.bf16.mxu0 0
      %317 = vmatpush1.bf16.msra.mxu0 0
      %318 = vmatprep.subr.bf16.mxu0 0
      %319 = vmatpush1.bf16.msra.mxu0 0
      %320 = vmatprep.subr.bf16.mxu0 0
      %321 = vmatpush1.bf16.msra.mxu0 0
      %322 = vmatprep.subr.bf16.mxu0 0
      %323 = vmatpush1.bf16.msra.mxu0 0
      %324 = vmatprep.subr.bf16.mxu0 0
      %325 = vmatpush1.bf16.msra.mxu0 0
      %326 = vmatprep.subr.bf16.mxu0 0
      %327 = vmatpush1.bf16.msra.mxu0 0
      %328 = vmatprep.subr.bf16.mxu0 0
      %329 = vmatpush1.bf16.msra.mxu0 0
      %330 = vmatprep.mubr.bf16.mxu0 0
      %331 = vmatmul.mubr.bf16.gmra.mrb[0].mxu0 %v242
      %v332 = vpop.f32.mrb[0].mxu0
      %v333 = vadd.f32 0.0, %v332
      %v334 = vpop.f32.mrb[0].mxu0
      %v335 = vpop.f32.mrb[0].mxu0
      %v336 = vadd.f32 0.0, %v335
      %v337 = vpop.f32.mrb[0].mxu0
      %338 = vmatprep.mubr.bf16.mxu0 0
      %339 = vmatmul.mubr.bf16.gmra.mrb[0].mxu0 %v243
      %v340 = vpop.f32.mrb[0].mxu0
      %v341 = vadd.f32 0.0, %v340
      %v342 = vpop.f32.mrb[0].mxu0
      %v343 = vpop.f32.mrb[0].mxu0
      %v344 = vadd.f32 0.0, %v343
      %v345 = vpop.f32.mrb[0].mxu0
      %346 = vmatprep.mubr.bf16.mxu0 0
      %347 = vmatmul.mubr.bf16.gmra.mrb[0].mxu0 %v244
      %v348 = vpop.f32.mrb[0].mxu0
      %v349 = vadd.f32 0.0, %v348
      %v350 = vpop.f32.mrb[0].mxu0
      %v351 = vpop.f32.mrb[0].mxu0
      %v352 = vadd.f32 0.0, %v351
      %v353 = vpop.f32.mrb[0].mxu0
      %354 = vmatprep.mubr.bf16.mxu0 0
      %355 = vmatmul.mubr.bf16.gmra.mrb[0].mxu0 %v245
      %v356 = vpop.f32.mrb[0].mxu0
      %v357 = vadd.f32 0.0, %v356
      %v358 = vpop.f32.mrb[0].mxu0
      %v359 = vpop.f32.mrb[0].mxu0
      %v360 = vadd.f32 0.0, %v359
      %v361 = vpop.f32.mrb[0].mxu0
      %362 = vdwg.mxu0
      %v363 = vld [vmem:[%s2] sm:$0x1]
      %v365 = vlaneseq
      %v366 = vshrl.u32 %v365, 7
      %v367 = vsub.s32 0, %v366
      %v368 = vrot.slane %v363, %v367
      %v370 = vmul.f32 %v333, %v368
      %v371 = vmul.f32 %v336, %v368
      %v372 = vmul.f32 %v341, %v368
      %v373 = vmul.f32 %v344, %v368
      %v374 = vmul.f32 %v349, %v368
      %v375 = vmul.f32 %v352, %v368
      %v376 = vmul.f32 %v357, %v368
      %v377 = vmul.f32 %v360, %v368
      %v378 = vld [vmem:[%s3] sm:$0x1]
      %v380 = vlaneseq
      %v381 = vshrl.u32 %v380, 7
      %v382 = vsub.s32 0, %v381
      %v383 = vrot.slane %v378, %v382
      %v385 = vadd.f32 %v370, %v383
      %v386 = vadd.f32 %v371, %v383
      %v387 = vadd.f32 %v372, %v383
      %v388 = vadd.f32 %v373, %v383
      %v389 = vadd.f32 %v374, %v383
      %v390 = vadd.f32 %v375, %v383
      %v391 = vadd.f32 %v376, %v383
      %v392 = vadd.f32 %v377, %v383
      %v393 = vmax.f32 %v385, 0.0
      %v394 = vmax.f32 %v386, 0.0
      %v395 = vmax.f32 %v387, 0.0
      %v396 = vmax.f32 %v388, 0.0
      %v397 = vmax.f32 %v389, 0.0
      %v398 = vmax.f32 %v390, 0.0
      %v399 = vmax.f32 %v391, 0.0
      %v400 = vmax.f32 %v392, 0.0
      %v401 = vpack.c.bf16 %v394, %v393
      %v402 = vpack.c.bf16 %v396, %v395
      %v403 = vpack.c.bf16 %v398, %v397
      %v404 = vpack.c.bf16 %v400, %v399
      %v409 = vunpack.c.l.b16 %v401
      %v410 = vunpack.c.h.b16 %v401
      %v411 = vunpack.c.l.b16 %v402
      %v412 = vunpack.c.h.b16 %v402
      %v413 = vunpack.c.l.b16 %v403
      %v414 = vunpack.c.h.b16 %v403
      %v415 = vunpack.c.l.b16 %v404
      %v416 = vunpack.c.h.b16 %v404
      %v417 = vpack.c.b16 %v409, %v409
      %v418 = vpack.c.b16 %v410, %v410
      %v419 = vpack.c.b16 %v411, %v411
      %v420 = vpack.c.b16 %v412, %v412
      %v421 = vpack.c.b16 %v413, %v413
      %v422 = vpack.c.b16 %v414, %v414
      %v423 = vpack.c.b16 %v415, %v415
      %v424 = vpack.c.b16 %v416, %v416
      %433 = vst [vmem:[%s199] sm:$0xf] %v417
      %434 = vst [vmem:[%s199 + $0x4] sm:$0xf] %v418
      %435 = vst [vmem:[%s199 + $0x8] sm:$0xf] %v419
      %436 = vst [vmem:[%s199 + $0xc] sm:$0xf] %v420
      %437 = vst [vmem:[%s199 + $0x10] sm:$0xf] %v421
      %438 = vst [vmem:[%s199 + $0x14] sm:$0xf] %v422
      %439 = vst [vmem:[%s199 + $0x18] sm:$0xf] %v423
      %440 = vst [vmem:[%s199 + $0x1c] sm:$0xf] %v424
      %s441 = smul.u32 8, %s15
      %p442 = scmp.lt.s32.totalorder %s441, 15
      %s443 = scalar_select %p442, %s441, 15
      %s444 = smul.addr %s443, 4
      %s445 = scalar_lea.vmem %s4, %s444
      // Predicated region
      $region37: #{_lambda_.2} parent=35 // pred_check
        %p446 = pneg %p122
      $region38: #{_lambda_.2} parent=35 // pred_check_branch
        %448 = sbr.rel (%p446) target = $region40
      $region39: #{_lambda_.2} parent=35 // pred_region
        %s449 = smul.u32 8, %s15
      $region40: #{_lambda_.2} parent=35 // pred_fallthru
        _
    $region36: #{_lambda_.2} parent=5 // pred_fallthru
      _
    %p450 = scmp.le.s32.totalorder 2, %s10
    // Predicated region
    $region41: #{_lambda_.2} parent=5 // pred_check
      %p451 = pneg %p450
    $region42: #{_lambda_.2} parent=5 // pred_check_branch
      %453 = sbr.rel (%p451) target = $region44
    $region43: #{_lambda_.2} parent=5 // pred_region
      %s454 = ssub.s32 %s10, 2
      // Predicated region
      $region45: #{_lambda_.2} parent=43 // pred_check
        %p455 = pneg %p128
      $region46: #{_lambda_.2} parent=43 // pred_check_branch
        %457 = sbr.rel (%p455) target = $region48
      $region47: #{_lambda_.2} parent=43 // pred_region
        %s458 = smul.u32 8, %s16
        %p459 = scmp.lt.s32.totalorder %s458, 15
        %s460 = scalar_select %p459, %s458, 15
        %s461 = smul.addr %s460, 4
        %s462 = scalar_lea.vmem %s4, %s461
      $region48: #{_lambda_.2} parent=43 // pred_fallthru
        _
    $region44: #{_lambda_.2} parent=5 // pred_fallthru
      _
  $region6: #{_lambda_.2} parent=0 // loop_footer
    %s14 = sadd.s32 1, %s10
  $region7: #{_lambda_.2} parent=0 // loop_footer_branch
    %9 = sbr.rel target = $region3
  $region8: #{_lambda_.2} parent=0 // loop_exit
    _

// kernel: _lambda_.3
$region0: #{_lambda_.3}
  #allocation0 [shape = 'u32[]', space=smem, size = 0x4, offset = 0x4, fixed_abs, tag = 'smem constant byte address 0x4 - core index']
  #allocation1 [shape = 'u32[144,128]{1,0:T(1,128)}', space=vmem, size = 0x12000, scoped, tag = 'internal scratch']
  %s0 = inlined_call_operand.vmem [shape: bf16[128,128], index: 0, kind: input, shape index: {}]
  %s1 = inlined_call_operand.vmem [shape: bf16[128,128], index: 1, kind: input, shape index: {}]
  %s2 = inlined_call_operand.vmem [shape: f32[1,128], index: 2, kind: input, shape index: {}]
  %s3 = inlined_call_operand.vmem [shape: f32[1,128], index: 3, kind: input, shape index: {}]
  %s4 = inlined_call_operand.vmem [shape: bf16[128,128], index: 4, kind: input, shape index: {}]
  %s5 = inlined_call_operand.vmem [shape: bf16[128,128], index: 5, kind: input, shape index: {}]
  %s6 = inlined_call_operand.vmem [shape: f32[1,128], index: 6, kind: input, shape index: {}]
  %s7 = inlined_call_operand.vmem [shape: f32[1,128], index: 7, kind: input, shape index: {}]
  %s8 = inlined_call_operand.vmem [shape: bf16[128,128], index: 8, kind: output, shape index: {}]
  %s9 = sld [smem:[#allocation0]]
  $region65: #{_lambda_.3} parent=0
    _
  %s11 = ssub.s32 1, %s9
  %s12 = scalar_select 0, %s11, %s9
  loop: start=0, step=1, limit=4
  $region2: #{_lambda_.3} parent=0 // loop_pre_header
    _
  $region3: #{_lambda_.3} parent=0 // loop_header
    %s14 = sphi 0, %s18
    %p15 = scmp.ge.s32.totalorder %s14, 4
    %s24 = sphi 0, %s26
    %s27 = sphi 0, %s24
    %s28 = sphi 0, %s27
    %s44 = sphi 0, %s28
    %s48 = sphi 0, %s48
    %s50 = sphi 0, %s48
    %s51 = sphi 0, %s50
    %s65 = sphi 0, %s51
    %s69 = sphi 0, %s69
    %s71 = sphi 0, %s69
    %s72 = sphi 0, %s71
    %s86 = sphi 0, %s72
    %s90 = sphi 0, %s90
    %s92 = sphi 0, %s90
    %s93 = sphi 0, %s92
    %s107 = sphi 0, %s93
    %s113 = sphi 0, %s115
    %s116 = sphi 0, %s113
    %s117 = sphi 0, %s116
    %s133 = sphi 0, %s117
    %s137 = sphi 0, %s137
    %s139 = sphi 0, %s137
    %s140 = sphi 0, %s139
    %s154 = sphi 0, %s140
    %s158 = sphi 0, %s158
    %s160 = sphi 0, %s158
    %s161 = sphi 0, %s160
    %s175 = sphi 0, %s161
    %s179 = sphi 0, %s179
    %s181 = sphi 0, %s179
    %s182 = sphi 0, %s181
    %s196 = sphi 0, %s182
    %s202 = sphi 0, %s204
    %s205 = sphi 0, %s202
    %s206 = sphi 0, %s205
    %s222 = sphi 0, %s206
  $region4: #{_lambda_.3} parent=0 // loop_header_branch
    %17 = sbr.rel (%p15) target = $region8
  $region5: #{_lambda_.3} parent=0 // loop_body
    %s19 = ssub.s32 %s14, 1
    %s20 = ssub.s32 %s14, 2
    %s21 = sadd.s32 %s14, 1
    %s22 = ssub.s32 %s14, %s21
    %p23 = scmp.eq.s32.totalorder %s22, 0
    %s25 = sadd.s32 %s24, 1
    %s26 = scalar_select %p23, %s24, %s25
    %p29 = pneg %p23
    %p30 = scmp.eq.s32.totalorder %s14, 1
    %p31 = por %p29, %p30
    %p32 = scmp.ne.s32.totalorder %s24, %s27
    %p33 = scmp.eq.s32.totalorder %s14, 0
    %p34 = por %p32, %p33
    %p35 = scmp.ne.s32.totalorder %s24, %s27
    %p36 = scmp.eq.s32.totalorder %s19, 1
    %p37 = por %p35, %p36
    %p38 = scmp.ne.s32.totalorder %s27, %s28
    %p39 = scmp.eq.s32.totalorder %s19, 0
    %p40 = por %p38, %p39
    %p41 = scmp.ne.s32.totalorder %s27, %s28
    %p42 = scmp.eq.s32.totalorder %s20, 1
    %p43 = por %p41, %p42
    %p45 = scmp.ne.s32.totalorder %s28, %s44
    %p46 = scmp.eq.s32.totalorder %s20, 0
    %p47 = por %p45, %p46
    %s49 = sadd.s32 %s48, 1
    %p52 = scmp.eq.s32.totalorder %s14, 1
    %p53 = scmp.ne.s32.totalorder %s48, %s50
    %p54 = scmp.eq.s32.totalorder %s14, 0
    %p55 = por %p53, %p54
    %p56 = scmp.ne.s32.totalorder %s48, %s50
    %p57 = scmp.eq.s32.totalorder %s19, 1
    %p58 = por %p56, %p57
    %p59 = scmp.ne.s32.totalorder %s50, %s51
    %p60 = scmp.eq.s32.totalorder %s19, 0
    %p61 = por %p59, %p60
    %p62 = scmp.ne.s32.totalorder %s50, %s51
    %p63 = scmp.eq.s32.totalorder %s20, 1
    %p64 = por %p62, %p63
    %p66 = scmp.ne.s32.totalorder %s51, %s65
    %p67 = scmp.eq.s32.totalorder %s20, 0
    %p68 = por %p66, %p67
    %s70 = sadd.s32 %s69, 1
    %p73 = scmp.eq.s32.totalorder %s14, 1
    %p74 = scmp.ne.s32.totalorder %s69, %s71
    %p75 = scmp.eq.s32.totalorder %s14, 0
    %p76 = por %p74, %p75
    %p77 = scmp.ne.s32.totalorder %s69, %s71
    %p78 = scmp.eq.s32.totalorder %s19, 1
    %p79 = por %p77, %p78
    %p80 = scmp.ne.s32.totalorder %s71, %s72
    %p81 = scmp.eq.s32.totalorder %s19, 0
    %p82 = por %p80, %p81
    %p83 = scmp.ne.s32.totalorder %s71, %s72
    %p84 = scmp.eq.s32.totalorder %s20, 1
    %p85 = por %p83, %p84
    %p87 = scmp.ne.s32.totalorder %s72, %s86
    %p88 = scmp.eq.s32.totalorder %s20, 0
    %p89 = por %p87, %p88
    %s91 = sadd.s32 %s90, 1
    %p94 = scmp.eq.s32.totalorder %s14, 1
    %p95 = scmp.ne.s32.totalorder %s90, %s92
    %p96 = scmp.eq.s32.totalorder %s14, 0
    %p97 = por %p95, %p96
    %p98 = scmp.ne.s32.totalorder %s90, %s92
    %p99 = scmp.eq.s32.totalorder %s19, 1
    %p100 = por %p98, %p99
    %p101 = scmp.ne.s32.totalorder %s92, %s93
    %p102 = scmp.eq.s32.totalorder %s19, 0
    %p103 = por %p101, %p102
    %p104 = scmp.ne.s32.totalorder %s92, %s93
    %p105 = scmp.eq.s32.totalorder %s20, 1
    %p106 = por %p104, %p105
    %p108 = scmp.ne.s32.totalorder %s93, %s107
    %p109 = scmp.eq.s32.totalorder %s20, 0
    %p110 = por %p108, %p109
    %s111 = ssub.s32 %s14, %s21
    %p112 = scmp.eq.s32.totalorder %s111, 0
    %s114 = sadd.s32 %s113, 1
    %s115 = scalar_select %p112, %s113, %s114
    %p118 = pneg %p112
    %p119 = scmp.eq.s32.totalorder %s14, 1
    %p120 = por %p118, %p119
    %p121 = scmp.ne.s32.totalorder %s113, %s116
    %p122 = scmp.eq.s32.totalorder %s14, 0
    %p123 = por %p121, %p122
    %p124 = scmp.ne.s32.totalorder %s113, %s116
    %p125 = scmp.eq.s32.totalorder %s19, 1
    %p126 = por %p124, %p125
    %p127 = scmp.ne.s32.totalorder %s116, %s117
    %p128 = scmp.eq.s32.totalorder %s19, 0
    %p129 = por %p127, %p128
    %p130 = scmp.ne.s32.totalorder %s116, %s117
    %p131 = scmp.eq.s32.totalorder %s20, 1
    %p132 = por %p130, %p131
    %p134 = scmp.ne.s32.totalorder %s117, %s133
    %p135 = scmp.eq.s32.totalorder %s20, 0
    %p136 = por %p134, %p135
    %s138 = sadd.s32 %s137, 1
    %p141 = scmp.eq.s32.totalorder %s14, 1
    %p142 = scmp.ne.s32.totalorder %s137, %s139
    %p143 = scmp.eq.s32.totalorder %s14, 0
    %p144 = por %p142, %p143
    %p145 = scmp.ne.s32.totalorder %s137, %s139
    %p146 = scmp.eq.s32.totalorder %s19, 1
    %p147 = por %p145, %p146
    %p148 = scmp.ne.s32.totalorder %s139, %s140
    %p149 = scmp.eq.s32.totalorder %s19, 0
    %p150 = por %p148, %p149
    %p151 = scmp.ne.s32.totalorder %s139, %s140
    %p152 = scmp.eq.s32.totalorder %s20, 1
    %p153 = por %p151, %p152
    %p155 = scmp.ne.s32.totalorder %s140, %s154
    %p156 = scmp.eq.s32.totalorder %s20, 0
    %p157 = por %p155, %p156
    %s159 = sadd.s32 %s158, 1
    %p162 = scmp.eq.s32.totalorder %s14, 1
    %p163 = scmp.ne.s32.totalorder %s158, %s160
    %p164 = scmp.eq.s32.totalorder %s14, 0
    %p165 = por %p163, %p164
    %p166 = scmp.ne.s32.totalorder %s158, %s160
    %p167 = scmp.eq.s32.totalorder %s19, 1
    %p168 = por %p166, %p167
    %p169 = scmp.ne.s32.totalorder %s160, %s161
    %p170 = scmp.eq.s32.totalorder %s19, 0
    %p171 = por %p169, %p170
    %p172 = scmp.ne.s32.totalorder %s160, %s161
    %p173 = scmp.eq.s32.totalorder %s20, 1
    %p174 = por %p172, %p173
    %p176 = scmp.ne.s32.totalorder %s161, %s175
    %p177 = scmp.eq.s32.totalorder %s20, 0
    %p178 = por %p176, %p177
    %s180 = sadd.s32 %s179, 1
    %p183 = scmp.eq.s32.totalorder %s14, 1
    %p184 = scmp.ne.s32.totalorder %s179, %s181
    %p185 = scmp.eq.s32.totalorder %s14, 0
    %p186 = por %p184, %p185
    %p187 = scmp.ne.s32.totalorder %s179, %s181
    %p188 = scmp.eq.s32.totalorder %s19, 1
    %p189 = por %p187, %p188
    %p190 = scmp.ne.s32.totalorder %s181, %s182
    %p191 = scmp.eq.s32.totalorder %s19, 0
    %p192 = por %p190, %p191
    %p193 = scmp.ne.s32.totalorder %s181, %s182
    %p194 = scmp.eq.s32.totalorder %s20, 1
    %p195 = por %p193, %p194
    %p197 = scmp.ne.s32.totalorder %s182, %s196
    %p198 = scmp.eq.s32.totalorder %s20, 0
    %p199 = por %p197, %p198
    %s200 = ssub.s32 %s14, %s21
    %p201 = scmp.eq.s32.totalorder %s200, 0
    %s203 = sadd.s32 %s202, 1
    %s204 = scalar_select %p201, %s202, %s203
    %p207 = pneg %p201
    %p208 = scmp.eq.s32.totalorder %s14, 1
    %p209 = por %p207, %p208
    %p210 = scmp.ne.s32.totalorder %s202, %s205
    %p211 = scmp.eq.s32.totalorder %s14, 0
    %p212 = por %p210, %p211
    %p213 = scmp.ne.s32.totalorder %s202, %s205
    %p214 = scmp.eq.s32.totalorder %s19, 1
    %p215 = por %p213, %p214
    %p216 = scmp.ne.s32.totalorder %s205, %s206
    %p217 = scmp.eq.s32.totalorder %s19, 0
    %p218 = por %p216, %p217
    %p219 = scmp.ne.s32.totalorder %s205, %s206
    %p220 = scmp.eq.s32.totalorder %s20, 1
    %p221 = por %p219, %p220
    %p223 = scmp.ne.s32.totalorder %s206, %s222
    %p224 = scmp.eq.s32.totalorder %s20, 0
    %p225 = por %p223, %p224
    %p226 = scmp.le.s32.totalorder 1, %s14
    %p227 = scmp.lt.s32.totalorder %s14, 3
    %p228 = pnand %p226, %p227
    %p229 = pneg %p228
    // Predicated region
    $region9: #{_lambda_.3} parent=5 // pred_check
      _
    $region10: #{_lambda_.3} parent=5 // pred_check_branch
      %231 = sbr.rel (%p228) target = $region12
    $region11: #{_lambda_.3} parent=5 // pred_region
      %s232 = ssub.s32 %s14, 1
      // Predicated region
      $region13: #{_lambda_.3} parent=11 // pred_check
        %p233 = pneg %p61
      $region14: #{_lambda_.3} parent=11 // pred_check_branch
        %235 = sbr.rel (%p233) target = $region16
      $region15: #{_lambda_.3} parent=11 // pred_region
        _
      $region16: #{_lambda_.3} parent=11 // pred_fallthru
        _
      // Predicated region
      $region17: #{_lambda_.3} parent=11 // pred_check
        %p236 = pneg %p82
      $region18: #{_lambda_.3} parent=11 // pred_check_branch
        %238 = sbr.rel (%p236) target = $region20
      $region19: #{_lambda_.3} parent=11 // pred_region
        _
      $region20: #{_lambda_.3} parent=11 // pred_fallthru
        _
      // Predicated region
      $region21: #{_lambda_.3} parent=11 // pred_check
        %p239 = pneg %p103
      $region22: #{_lambda_.3} parent=11 // pred_check_branch
        %241 = sbr.rel (%p239) target = $region24
      $region23: #{_lambda_.3} parent=11 // pred_region
        _
      $region24: #{_lambda_.3} parent=11 // pred_fallthru
        _
      // Predicated region
      $region25: #{_lambda_.3} parent=11 // pred_check
        %p242 = pneg %p150
      $region26: #{_lambda_.3} parent=11 // pred_check_branch
        %244 = sbr.rel (%p242) target = $region28
      $region27: #{_lambda_.3} parent=11 // pred_region
        _
      $region28: #{_lambda_.3} parent=11 // pred_fallthru
        _
      // Predicated region
      $region29: #{_lambda_.3} parent=11 // pred_check
        %p245 = pneg %p171
      $region30: #{_lambda_.3} parent=11 // pred_check_branch
        %247 = sbr.rel (%p245) target = $region32
      $region31: #{_lambda_.3} parent=11 // pred_region
        _
      $region32: #{_lambda_.3} parent=11 // pred_fallthru
        _
      // Predicated region
      $region33: #{_lambda_.3} parent=11 // pred_check
        %p248 = pneg %p192
      $region34: #{_lambda_.3} parent=11 // pred_check_branch
        %250 = sbr.rel (%p248) target = $region36
      $region35: #{_lambda_.3} parent=11 // pred_region
        _
      $region36: #{_lambda_.3} parent=11 // pred_fallthru
        _
    $region12: #{_lambda_.3} parent=5 // pred_fallthru
      _
    %p251 = scmp.lt.s32.totalorder %s14, 2
    // Predicated region
    $region37: #{_lambda_.3} parent=5 // pred_check
      %p252 = pneg %p251
    $region38: #{_lambda_.3} parent=5 // pred_check_branch
      %254 = sbr.rel (%p252) target = $region40
    $region39: #{_lambda_.3} parent=5 // pred_region
      // Predicated region
      $region41: #{_lambda_.3} parent=39 // pred_check
        %p255 = pneg %p34
      $region42: #{_lambda_.3} parent=39 // pred_check_branch
        %257 = sbr.rel (%p255) target = $region44
      $region43: #{_lambda_.3} parent=39 // pred_region
        %s258 = smul.u32 8, %s14
        %p259 = scmp.lt.s32.totalorder %s258, 15
        %s260 = scalar_select %p259, %s258, 15
        %s261 = smul.addr %s260, 4
        %s262 = scalar_lea.vmem %s0, %s261
        %s263 = smul.u32 8, %s14
      $region44: #{_lambda_.3} parent=39 // pred_fallthru
        _
      // Predicated region
      $region45: #{_lambda_.3} parent=39 // pred_check
        %p264 = pneg %p123
      $region46: #{_lambda_.3} parent=39 // pred_check_branch
        %266 = sbr.rel (%p264) target = $region48
      $region47: #{_lambda_.3} parent=39 // pred_region
        %s267 = smul.u32 8, %s14
        %p268 = scmp.lt.s32.totalorder %s267, 15
        %s269 = scalar_select %p268, %s267, 15
        %s270 = smul.addr %s269, 4
        %s271 = scalar_lea.vmem %s4, %s270
        %s272 = smul.u32 8, %s14
      $region48: #{_lambda_.3} parent=39 // pred_fallthru
        _
    $region40: #{_lambda_.3} parent=5 // pred_fallthru
      _
    %p273 = scmp.le.s32.totalorder 1, %s14
    %p274 = scmp.lt.s32.totalorder %s14, 3
    %p275 = pnand %p273, %p274
    %p276 = pneg %p275
    // Predicated region
    $region49: #{_lambda_.3} parent=5 // pred_check
      _
    $region50: #{_lambda_.3} parent=5 // pred_check_branch
      %278 = sbr.rel (%p275) target = $region52
    $region51: #{_lambda_.3} parent=5 // pred_region
      %s279 = ssub.s32 %s14, 1
      %s280 = smul.u32 8, %s19
      %p281 = scmp.lt.s32.totalorder %s280, 15
      %s282 = scalar_select %p281, %s280, 15
      %s283 = smul.addr %s282, 4
      %s284 = scalar_lea.vmem %s0, %s283
      %p285 = pneg %p40
      %p286 = pneg %p37
      %p287 = pneg %p61
      %p288 = pneg %p58
      %p289 = pneg %p82
      %p290 = pneg %p79
      %p291 = pneg %p103
      %p292 = pneg %p100
      %s293 = smul.u32 8, %s19
      %p294 = scmp.lt.s32.totalorder %s293, 15
      %s295 = scalar_select %p294, %s293, 15
      %s296 = smul.addr %s295, 4
      %s297 = scalar_lea.vmem %s4, %s296
      %p298 = pneg %p129
      %p299 = pneg %p126
      %p300 = pneg %p150
      %p301 = pneg %p147
      %p302 = pneg %p171
      %p303 = pneg %p168
      %p304 = pneg %p192
      %p305 = pneg %p189
      %p306 = pneg %p218
      %p307 = pneg %p215
      %s308 = smul.u32 8, %s19
      %p309 = scmp.lt.s32.totalorder %s308, 15
      %s310 = scalar_select %p309, %s308, 15
      %s311 = smul.addr %s310, 4
      %s312 = scalar_lea.vmem %s8, %s311
      %s313 = smul.u32 8, %s19
      %p314 = scmp.lt.s32.totalorder %s313, 15
      %s315 = scalar_select %p314, %s313, 15
      %s316 = smul.addr %s315, 4
      %s317 = scalar_lea.vmem %s0, %s316
      %s318 = smul.u32 8, %s19
      %s319 = smul.u32 8, %s19
      %p320 = scmp.lt.s32.totalorder %s319, 15
      %s321 = scalar_select %p320, %s319, 15
      %s322 = smul.addr %s321, 4
      %s323 = scalar_lea.vmem %s4, %s322
      %s324 = smul.u32 8, %s19
      %s325 = smul.u32 8, %s19
      %p326 = scmp.lt.s32.totalorder %s325, 15
      %s327 = scalar_select %p326, %s325, 15
      %s328 = smul.addr %s327, 4
      %s329 = scalar_lea.vmem %s8, %s328
      %s330 = smul.u32 8, %s19
      %v332 = vld [vmem:[%s317] sm:$0xf]
      %v333 = vld [vmem:[%s317 + $0x4] sm:$0xf]
      %v334 = vld [vmem:[%s317 + $0x8] sm:$0xf]
      %v335 = vld [vmem:[%s317 + $0xc] sm:$0xf]
      %v336 = vld [vmem:[%s317 + $0x10] sm:$0xf]
      %v337 = vld [vmem:[%s317 + $0x14] sm:$0xf]
      %v338 = vld [vmem:[%s317 + $0x18] sm:$0xf]
      %v339 = vld [vmem:[%s317 + $0x1c] sm:$0xf]
      %v340 = vld [vmem:[%s1] sm:$0xf]
      %v341 = vld [vmem:[%s1 + $0x4] sm:$0xf]
      %v342 = vld [vmem:[%s1 + $0x8] sm:$0xf]
      %v343 = vld [vmem:[%s1 + $0xc] sm:$0xf]
      %v344 = vld [vmem:[%s1 + $0x10] sm:$0xf]
      %v345 = vld [vmem:[%s1 + $0x14] sm:$0xf]
      %v346 = vld [vmem:[%s1 + $0x18] sm:$0xf]
      %v347 = vld [vmem:[%s1 + $0x1c] sm:$0xf]
      %v348 = vld [vmem:[%s1 + $0x20] sm:$0xf]
      %v349 = vld [vmem:[%s1 + $0x24] sm:$0xf]
      %v350 = vld [vmem:[%s1 + $0x28] sm:$0xf]
      %v351 = vld [vmem:[%s1 + $0x2c] sm:$0xf]
      %v352 = vld [vmem:[%s1 + $0x30] sm:$0xf]
      %v353 = vld [vmem:[%s1 + $0x34] sm:$0xf]
      %v354 = vld [vmem:[%s1 + $0x38] sm:$0xf]
      %v355 = vld [vmem:[%s1 + $0x3c] sm:$0xf]
      %v364 = vunpack.c.l.b16 %v332
      %v365 = vunpack.c.l.b16 %v333
      %v366 = vunpack.c.l.b16 %v334
      %v367 = vunpack.c.l.b16 %v335
      %v368 = vunpack.c.l.b16 %v336
      %v369 = vunpack.c.l.b16 %v337
      %v370 = vunpack.c.l.b16 %v338
      %v371 = vunpack.c.l.b16 %v339
      %v372 = vpack.c.b16 %v365, %v364
      %v373 = vpack.c.b16 %v367, %v366
      %v374 = vpack.c.b16 %v369, %v368
      %v375 = vpack.c.b16 %v371, %v370
      %v396 = vunpack.c.l.b16 %v340
      %v397 = vunpack.c.l.b16 %v341
      %v398 = vunpack.c.l.b16 %v342
      %v399 = vunpack.c.l.b16 %v343
      %v400 = vunpack.c.l.b16 %v344
      %v401 = vunpack.c.l.b16 %v345
      %v402 = vunpack.c.l.b16 %v346
      %v403 = vunpack.c.l.b16 %v347
      %v404 = vunpack.c.l.b16 %v348
      %v405 = vunpack.c.l.b16 %v349
      %v406 = vunpack.c.l.b16 %v350
      %v407 = vunpack.c.l.b16 %v351
      %v408 = vunpack.c.l.b16 %v352
      %v409 = vunpack.c.l.b16 %v353
      %v410 = vunpack.c.l.b16 %v354
      %v411 = vunpack.c.l.b16 %v355
      %v412 = vpack.c.b16 %v397, %v396
      %v413 = vpack.c.b16 %v399, %v398
      %v414 = vpack.c.b16 %v401, %v400
      %v415 = vpack.c.b16 %v403, %v402
      %v416 = vpack.c.b16 %v405, %v404
      %v417 = vpack.c.b16 %v407, %v406
      %v418 = vpack.c.b16 %v409, %v408
      %v419 = vpack.c.b16 %v411, %v410
      %428 = vmatprep.subr.bf16.mxu0 0
      %429 = vmatpush1.bf16.msra.mxu0 %v412
      %430 = vmatprep.subr.bf16.mxu0 0
      %431 = vmatpush1.bf16.msra.mxu0 %v413
      %432 = vmatprep.subr.bf16.mxu0 0
      %433 = vmatpush1.bf16.msra.mxu0 %v414
      %434 = vmatprep.subr.bf16.mxu0 0
      %435 = vmatpush1.bf16.msra.mxu0 %v415
      %436 = vmatprep.subr.bf16.mxu0 0
      %437 = vmatpush1.bf16.msra.mxu0 %v416
      %438 = vmatprep.subr.bf16.mxu0 0
      %439 = vmatpush1.bf16.msra.mxu0 %v417
      %440 = vmatprep.subr.bf16.mxu0 0
      %441 = vmatpush1.bf16.msra.mxu0 %v418
      %442 = vmatprep.subr.bf16.mxu0 0
      %443 = vmatpush1.bf16.msra.mxu0 %v419
      %444 = vmatprep.subr.bf16.mxu0 0
      %445 = vmatpush1.bf16.msra.mxu0 0
      %446 = vmatprep.subr.bf16.mxu0 0
      %447 = vmatpush1.bf16.msra.mxu0 0
      %448 = vmatprep.subr.bf16.mxu0 0
      %449 = vmatpush1.bf16.msra.mxu0 0
      %450 = vmatprep.subr.bf16.mxu0 0
      %451 = vmatpush1.bf16.msra.mxu0 0
      %452 = vmatprep.subr.bf16.mxu0 0
      %453 = vmatpush1.bf16.msra.mxu0 0
      %454 = vmatprep.subr.bf16.mxu0 0
      %455 = vmatpush1.bf16.msra.mxu0 0
      %456 = vmatprep.subr.bf16.mxu0 0
      %457 = vmatpush1.bf16.msra.mxu0 0
      %458 = vmatprep.subr.bf16.mxu0 0
      %459 = vmatpush1.bf16.msra.mxu0 0
      %460 = vmatprep.mubr.bf16.mxu0 0
      %461 = vmatmul.mubr.bf16.gmra.mrb[0].mxu0 %v372
      %v462 = vpop.f32.mrb[0].mxu0
      %v463 = vadd.f32 0.0, %v462
      %v464 = vpop.f32.mrb[0].mxu0
      %v465 = vpop.f32.mrb[0].mxu0
      %v466 = vadd.f32 0.0, %v465
      %v467 = vpop.f32.mrb[0].mxu0
      %468 = vmatprep.mubr.bf16.mxu0 0
      %469 = vmatmul.mubr.bf16.gmra.mrb[0].mxu0 %v373
      %v470 = vpop.f32.mrb[0].mxu0
      %v471 = vadd.f32 0.0, %v470
      %v472 = vpop.f32.mrb[0].mxu0
      %v473 = vpop.f32.mrb[0].mxu0
      %v474 = vadd.f32 0.0, %v473
      %v475 = vpop.f32.mrb[0].mxu0
      %476 = vmatprep.mubr.bf16.mxu0 0
      %477 = vmatmul.mubr.bf16.gmra.mrb[0].mxu0 %v374
      %v478 = vpop.f32.mrb[0].mxu0
      %v479 = vadd.f32 0.0, %v478
      %v480 = vpop.f32.mrb[0].mxu0
      %v481 = vpop.f32.mrb[0].mxu0
      %v482 = vadd.f32 0.0, %v481
      %v483 = vpop.f32.mrb[0].mxu0
      %484 = vmatprep.mubr.bf16.mxu0 0
      %485 = vmatmul.mubr.bf16.gmra.mrb[0].mxu0 %v375
      %v486 = vpop.f32.mrb[0].mxu0
      %v487 = vadd.f32 0.0, %v486
      %v488 = vpop.f32.mrb[0].mxu0
      %v489 = vpop.f32.mrb[0].mxu0
      %v490 = vadd.f32 0.0, %v489
      %v491 = vpop.f32.mrb[0].mxu0
      %492 = vdwg.mxu0
      %v493 = vld [vmem:[%s2] sm:$0x1]
      %v495 = vlaneseq
      %v496 = vshrl.u32 %v495, 7
      %v497 = vsub.s32 0, %v496
      %v498 = vrot.slane %v493, %v497
      %v500 = vmul.f32 %v463, %v498
      %v501 = vmul.f32 %v466, %v498
      %v502 = vmul.f32 %v471, %v498
      %v503 = vmul.f32 %v474, %v498
      %v504 = vmul.f32 %v479, %v498
      %v505 = vmul.f32 %v482, %v498
      %v506 = vmul.f32 %v487, %v498
      %v507 = vmul.f32 %v490, %v498
      %v508 = vld [vmem:[%s3] sm:$0x1]
      %v510 = vlaneseq
      %v511 = vshrl.u32 %v510, 7
      %v512 = vsub.s32 0, %v511
      %v513 = vrot.slane %v508, %v512
      %v515 = vadd.f32 %v500, %v513
      %v516 = vadd.f32 %v501, %v513
      %v517 = vadd.f32 %v502, %v513
      %v518 = vadd.f32 %v503, %v513
      %v519 = vadd.f32 %v504, %v513
      %v520 = vadd.f32 %v505, %v513
      %v521 = vadd.f32 %v506, %v513
      %v522 = vadd.f32 %v507, %v513
      %v523 = vld [vmem:[%s323] sm:$0xf]
      %v524 = vld [vmem:[%s323 + $0x4] sm:$0xf]
      %v525 = vld [vmem:[%s323 + $0x8] sm:$0xf]
      %v526 = vld [vmem:[%s323 + $0xc] sm:$0xf]
      %v527 = vld [vmem:[%s323 + $0x10] sm:$0xf]
      %v528 = vld [vmem:[%s323 + $0x14] sm:$0xf]
      %v529 = vld [vmem:[%s323 + $0x18] sm:$0xf]
      %v530 = vld [vmem:[%s323 + $0x1c] sm:$0xf]
      %v531 = vld [vmem:[%s5] sm:$0xf]
      %v532 = vld [vmem:[%s5 + $0x4] sm:$0xf]
      %v533 = vld [vmem:[%s5 + $0x8] sm:$0xf]
      %v534 = vld [vmem:[%s5 + $0xc] sm:$0xf]
      %v535 = vld [vmem:[%s5 + $0x10] sm:$0xf]
      %v536 = vld [vmem:[%s5 + $0x14] sm:$0xf]
      %v537 = vld [vmem:[%s5 + $0x18] sm:$0xf]
      %v538 = vld [vmem:[%s5 + $0x1c] sm:$0xf]
      %v539 = vld [vmem:[%s5 + $0x20] sm:$0xf]
      %v540 = vld [vmem:[%s5 + $0x24] sm:$0xf]
      %v541 = vld [vmem:[%s5 + $0x28] sm:$0xf]
      %v542 = vld [vmem:[%s5 + $0x2c] sm:$0xf]
      %v543 = vld [vmem:[%s5 + $0x30] sm:$0xf]
      %v544 = vld [vmem:[%s5 + $0x34] sm:$0xf]
      %v545 = vld [vmem:[%s5 + $0x38] sm:$0xf]
      %v546 = vld [vmem:[%s5 + $0x3c] sm:$0xf]
      %v555 = vunpack.c.l.b16 %v523
      %v556 = vunpack.c.l.b16 %v524
      %v557 = vunpack.c.l.b16 %v525
      %v558 = vunpack.c.l.b16 %v526
      %v559 = vunpack.c.l.b16 %v527
      %v560 = vunpack.c.l.b16 %v528
      %v561 = vunpack.c.l.b16 %v529
      %v562 = vunpack.c.l.b16 %v530
      %v563 = vpack.c.b16 %v556, %v555
      %v564 = vpack.c.b16 %v558, %v557
      %v565 = vpack.c.b16 %v560, %v559
      %v566 = vpack.c.b16 %v562, %v561
      %v587 = vunpack.c.l.b16 %v531
      %v588 = vunpack.c.l.b16 %v532
      %v589 = vunpack.c.l.b16 %v533
      %v590 = vunpack.c.l.b16 %v534
      %v591 = vunpack.c.l.b16 %v535
      %v592 = vunpack.c.l.b16 %v536
      %v593 = vunpack.c.l.b16 %v537
      %v594 = vunpack.c.l.b16 %v538
      %v595 = vunpack.c.l.b16 %v539
      %v596 = vunpack.c.l.b16 %v540
      %v597 = vunpack.c.l.b16 %v541
      %v598 = vunpack.c.l.b16 %v542
      %v599 = vunpack.c.l.b16 %v543
      %v600 = vunpack.c.l.b16 %v544
      %v601 = vunpack.c.l.b16 %v545
      %v602 = vunpack.c.l.b16 %v546
      %v603 = vpack.c.b16 %v588, %v587
      %v604 = vpack.c.b16 %v590, %v589
      %v605 = vpack.c.b16 %v592, %v591
      %v606 = vpack.c.b16 %v594, %v593
      %v607 = vpack.c.b16 %v596, %v595
      %v608 = vpack.c.b16 %v598, %v597
      %v609 = vpack.c.b16 %v600, %v599
      %v610 = vpack.c.b16 %v602, %v601
      %619 = vmatprep.subr.bf16.mxu0 0
      %620 = vmatpush1.bf16.msra.mxu0 %v603
      %621 = vmatprep.subr.bf16.mxu0 0
      %622 = vmatpush1.bf16.msra.mxu0 %v604
      %623 = vmatprep.subr.bf16.mxu0 0
      %624 = vmatpush1.bf16.msra.mxu0 %v605
      %625 = vmatprep.subr.bf16.mxu0 0
      %626 = vmatpush1.bf16.msra.mxu0 %v606
      %627 = vmatprep.subr.bf16.mxu0 0
      %628 = vmatpush1.bf16.msra.mxu0 %v607
      %629 = vmatprep.subr.bf16.mxu0 0
      %630 = vmatpush1.bf16.msra.mxu0 %v608
      %631 = vmatprep.subr.bf16.mxu0 0
      %632 = vmatpush1.bf16.msra.mxu0 %v609
      %633 = vmatprep.subr.bf16.mxu0 0
      %634 = vmatpush1.bf16.msra.mxu0 %v610
      %635 = vmatprep.subr.bf16.mxu0 0
      %636 = vmatpush1.bf16.msra.mxu0 0
      %637 = vmatprep.subr.bf16.mxu0 0
      %638 = vmatpush1.bf16.msra.mxu0 0
      %639 = vmatprep.subr.bf16.mxu0 0
      %640 = vmatpush1.bf16.msra.mxu0 0
      %641 = vmatprep.subr.bf16.mxu0 0
      %642 = vmatpush1.bf16.msra.mxu0 0
      %643 = vmatprep.subr.bf16.mxu0 0
      %644 = vmatpush1.bf16.msra.mxu0 0
      %645 = vmatprep.subr.bf16.mxu0 0
      %646 = vmatpush1.bf16.msra.mxu0 0
      %647 = vmatprep.subr.bf16.mxu0 0
      %648 = vmatpush1.bf16.msra.mxu0 0
      %649 = vmatprep.subr.bf16.mxu0 0
      %650 = vmatpush1.bf16.msra.mxu0 0
      %651 = vmatprep.mubr.bf16.mxu0 0
      %652 = vmatmul.mubr.bf16.gmra.mrb[0].mxu0 %v563
      %v653 = vpop.f32.mrb[0].mxu0
      %v654 = vadd.f32 0.0, %v653
      %v655 = vpop.f32.mrb[0].mxu0
      %v656 = vpop.f32.mrb[0].mxu0
      %v657 = vadd.f32 0.0, %v656
      %v658 = vpop.f32.mrb[0].mxu0
      %659 = vmatprep.mubr.bf16.mxu0 0
      %660 = vmatmul.mubr.bf16.gmra.mrb[0].mxu0 %v564
      %v661 = vpop.f32.mrb[0].mxu0
      %v662 = vadd.f32 0.0, %v661
      %v663 = vpop.f32.mrb[0].mxu0
      %v664 = vpop.f32.mrb[0].mxu0
      %v665 = vadd.f32 0.0, %v664
      %v666 = vpop.f32.mrb[0].mxu0
      %667 = vmatprep.mubr.bf16.mxu0 0
      %668 = vmatmul.mubr.bf16.gmra.mrb[0].mxu0 %v565
      %v669 = vpop.f32.mrb[0].mxu0
      %v670 = vadd.f32 0.0, %v669
      %v671 = vpop.f32.mrb[0].mxu0
      %v672 = vpop.f32.mrb[0].mxu0
      %v673 = vadd.f32 0.0, %v672
      %v674 = vpop.f32.mrb[0].mxu0
      %675 = vmatprep.mubr.bf16.mxu0 0
      %676 = vmatmul.mubr.bf16.gmra.mrb[0].mxu0 %v566
      %v677 = vpop.f32.mrb[0].mxu0
      %v678 = vadd.f32 0.0, %v677
      %v679 = vpop.f32.mrb[0].mxu0
      %v680 = vpop.f32.mrb[0].mxu0
      %v681 = vadd.f32 0.0, %v680
      %v682 = vpop.f32.mrb[0].mxu0
      %683 = vdwg.mxu0
      %v684 = vld [vmem:[%s6] sm:$0x1]
      %v686 = vlaneseq
      %v687 = vshrl.u32 %v686, 7
      %v688 = vsub.s32 0, %v687
      %v689 = vrot.slane %v684, %v688
      %v691 = vmul.f32 %v654, %v689
      %v692 = vmul.f32 %v657, %v689
      %v693 = vmul.f32 %v662, %v689
      %v694 = vmul.f32 %v665, %v689
      %v695 = vmul.f32 %v670, %v689
      %v696 = vmul.f32 %v673, %v689
      %v697 = vmul.f32 %v678, %v689
      %v698 = vmul.f32 %v681, %v689
      %v699 = vld [vmem:[%s7] sm:$0x1]
      %v701 = vlaneseq
      %v702 = vshrl.u32 %v701, 7
      %v703 = vsub.s32 0, %v702
      %v704 = vrot.slane %v699, %v703
      %v706 = vadd.f32 %v691, %v704
      %v707 = vadd.f32 %v692, %v704
      %v708 = vadd.f32 %v693, %v704
      %v709 = vadd.f32 %v694, %v704
      %v710 = vadd.f32 %v695, %v704
      %v711 = vadd.f32 %v696, %v704
      %v712 = vadd.f32 %v697, %v704
      %v713 = vadd.f32 %v698, %v704
      %v714 = vadd.f32 %v515, %v706
      %v715 = vadd.f32 %v516, %v707
      %v716 = vadd.f32 %v517, %v708
      %v717 = vadd.f32 %v518, %v709
      %v718 = vadd.f32 %v519, %v710
      %v719 = vadd.f32 %v520, %v711
      %v720 = vadd.f32 %v521, %v712
      %v721 = vadd.f32 %v522, %v713
      %v722 = vmax.f32 %v714, 0.0
      %v723 = vmax.f32 %v715, 0.0
      %v724 = vmax.f32 %v716, 0.0
      %v725 = vmax.f32 %v717, 0.0
      %v726 = vmax.f32 %v718, 0.0
      %v727 = vmax.f32 %v719, 0.0
      %v728 = vmax.f32 %v720, 0.0
      %v729 = vmax.f32 %v721, 0.0
      %v730 = vpack.c.bf16 %v723, %v722
      %v731 = vpack.c.bf16 %v725, %v724
      %v732 = vpack.c.bf16 %v727, %v726
      %v733 = vpack.c.bf16 %v729, %v728
      %v738 = vunpack.c.l.b16 %v730
      %v739 = vunpack.c.h.b16 %v730
      %v740 = vunpack.c.l.b16 %v731
      %v741 = vunpack.c.h.b16 %v731
      %v742 = vunpack.c.l.b16 %v732
      %v743 = vunpack.c.h.b16 %v732
      %v744 = vunpack.c.l.b16 %v733
      %v745 = vunpack.c.h.b16 %v733
      %v746 = vpack.c.b16 %v738, %v738
      %v747 = vpack.c.b16 %v739, %v739
      %v748 = vpack.c.b16 %v740, %v740
      %v749 = vpack.c.b16 %v741, %v741
      %v750 = vpack.c.b16 %v742, %v742
      %v751 = vpack.c.b16 %v743, %v743
      %v752 = vpack.c.b16 %v744, %v744
      %v753 = vpack.c.b16 %v745, %v745
      %762 = vst [vmem:[%s329] sm:$0xf] %v746
      %763 = vst [vmem:[%s329 + $0x4] sm:$0xf] %v747
      %764 = vst [vmem:[%s329 + $0x8] sm:$0xf] %v748
      %765 = vst [vmem:[%s329 + $0xc] sm:$0xf] %v749
      %766 = vst [vmem:[%s329 + $0x10] sm:$0xf] %v750
      %767 = vst [vmem:[%s329 + $0x14] sm:$0xf] %v751
      %768 = vst [vmem:[%s329 + $0x18] sm:$0xf] %v752
      %769 = vst [vmem:[%s329 + $0x1c] sm:$0xf] %v753
      %s770 = smul.u32 8, %s19
      %p771 = scmp.lt.s32.totalorder %s770, 15
      %s772 = scalar_select %p771, %s770, 15
      %s773 = smul.addr %s772, 4
      %s774 = scalar_lea.vmem %s8, %s773
      // Predicated region
      $region53: #{_lambda_.3} parent=51 // pred_check
        %p775 = pneg %p215
      $region54: #{_lambda_.3} parent=51 // pred_check_branch
        %777 = sbr.rel (%p775) target = $region56
      $region55: #{_lambda_.3} parent=51 // pred_region
        %s778 = smul.u32 8, %s19
      $region56: #{_lambda_.3} parent=51 // pred_fallthru
        _
    $region52: #{_lambda_.3} parent=5 // pred_fallthru
      _
    %p779 = scmp.le.s32.totalorder 2, %s14
    // Predicated region
    $region57: #{_lambda_.3} parent=5 // pred_check
      %p780 = pneg %p779
    $region58: #{_lambda_.3} parent=5 // pred_check_branch
      %782 = sbr.rel (%p780) target = $region60
    $region59: #{_lambda_.3} parent=5 // pred_region
      %s783 = ssub.s32 %s14, 2
      // Predicated region
      $region61: #{_lambda_.3} parent=59 // pred_check
        %p784 = pneg %p221
      $region62: #{_lambda_.3} parent=59 // pred_check_branch
        %786 = sbr.rel (%p784) target = $region64
      $region63: #{_lambda_.3} parent=59 // pred_region
        %s787 = smul.u32 8, %s20
        %p788 = scmp.lt.s32.totalorder %s787, 15
        %s789 = scalar_select %p788, %s787, 15
        %s790 = smul.addr %s789, 4
        %s791 = scalar_lea.vmem %s8, %s790
      $region64: #{_lambda_.3} parent=59 // pred_fallthru
        _
    $region60: #{_lambda_.3} parent=5 // pred_fallthru
      _
  $region6: #{_lambda_.3} parent=0 // loop_footer
    %s18 = sadd.s32 1, %s14
  $region7: #{_lambda_.3} parent=0 // loop_footer_branch
    %13 = sbr.rel target = $region3
  $region8: #{_lambda_.3} parent=0 // loop_exit
    _

</llo_original>
